<compile_context>
chip_gen: v5e
topology: v5e:2x2
jax: 0.10.0
libtpu: 0.0.40
codegen_flags: <defaults>
</compile_context>

<pallas_src>
import functools

import jax
import jax.numpy as jnp
from jax.experimental import pallas as pl
from jax.experimental.pallas import tpu as pltpu


# ----------------------------------------------------------------------------
# Kernel: one (TB, C, TL) slab = TB batch rows x one lane-tile of the length
# axis. The channel reduction (axis=1) is fully inside the block, so every
# grid point is independent -> both grid axes are "parallel".
# ----------------------------------------------------------------------------
def layernorm_kernel(x_ref, g_ref, o_ref, *, eps):
    x = x_ref[...].astype(jnp.float32)            # (TB, C, TL), stats in f32
    mean = jnp.mean(x, axis=1, keepdims=True)     # (TB, 1, TL) sublane reduction
    xc = x - mean                                 # needed for the output anyway
    var = jnp.mean(xc * xc, axis=1, keepdims=True)  # biased var (unbiased=False)
    inv = jax.lax.rsqrt(var + eps)                # EUP rsqrt
    # g_ref is (C, 1) f32 and broadcasts against (TB, C, TL).
    o_ref[...] = (xc * inv * g_ref[...]).astype(o_ref.dtype)


# ----------------------------------------------------------------------------
# Tiling helpers
# ----------------------------------------------------------------------------
def _round_up(n, m):
    return ((n + m - 1) // m) * m


def _pick_tiles(B, C, L_pad, itemsize, target_block_bytes):
    """Pick (TB, TL) so one block is ~target_block_bytes, lane-dense, even grid."""
    # Lane tile: largest multiple of 128 dividing L_pad, capped so a single
    # (1, C, TL) row does not already exceed the per-block byte target.
    row_cap = max(128, (target_block_bytes // (C * itemsize)) // 128 * 128)
    tl = min(L_pad, row_cap)
    tl -= tl % 128
    while tl >= 128 and L_pad % tl != 0:
        tl -= 128
    if tl < 128:
        tl = L_pad            # L_pad is always a multiple of 128, so tl >= 128

    # Batch tile: largest divisor of B keeping the block near the byte target.
    row_bytes = C * tl * itemsize
    tb = max(1, min(B, int(target_block_bytes // row_bytes)))
    while B % tb != 0:
        tb -= 1

    # Keep >= 2 grid steps when possible so both v7x TensorCores get work.
    if (B // tb) * (L_pad // tl) < 2 and B >= 2:
        tb = max(1, B // 2)
        while B % tb != 0:
            tb -= 1
    return tb, tl


# ----------------------------------------------------------------------------
# Wrapper
# ----------------------------------------------------------------------------
def layer_norm(x, g, eps=None, lane_tile=None, batch_tile=None,
               target_block_bytes=2 * 1024 * 1024):
    """x: (B, C, L); g: (1, C, 1) or (C,). Normalizes over the channel dim."""
    B, C, L = x.shape
    if eps is None:
        # Matches the PyTorch module: 1e-5 for float32, 1e-3 otherwise.
        eps = 1e-5 if x.dtype == jnp.float32 else 1e-3
    g2 = jnp.asarray(g, jnp.float32).reshape(C, 1)   # pre-cast; VMEM-resident

    # Pad L to a multiple of 128 so output stores are lane-dense (no vst.msk).
    L_pad = _round_up(L, 128)
    xp = x if L_pad == L else jnp.pad(x, ((0, 0), (0, 0), (0, L_pad - L)))

    itemsize = jnp.dtype(x.dtype).itemsize
    tb, tl = _pick_tiles(B, C, L_pad, itemsize, target_block_bytes)

    if lane_tile is not None:
        if lane_tile % 128 != 0 and lane_tile != L_pad:
            raise ValueError(
                f"lane_tile must be a multiple of 128 (or the full padded "
                f"length {L_pad}); got {lane_tile}")
        if L_pad % lane_tile != 0:
            raise ValueError(
                f"lane_tile={lane_tile} must divide the padded length {L_pad}")
        tl = lane_tile
    if batch_tile is not None:
        if B % batch_tile != 0:
            raise ValueError(f"batch_tile={batch_tile} must divide batch {B}")
        tb = batch_tile

    grid = (B // tb, L_pad // tl)

    # VMEM budget: double-buffered in + out blocks (input dtype) plus ~2x f32
    # intermediates for the live compute block (x_f32 / centered copy), + slack.
    block_elems = tb * C * tl
    vmem_est = 4 * block_elems * itemsize + 2 * block_elems * 4 + (1 << 20)
    vmem_limit = int(min(48 * 1024 * 1024, max(2 * vmem_est, 16 * 1024 * 1024)))

    kernel = functools.partial(layernorm_kernel, eps=float(eps))

    out = pl.pallas_call(
        kernel,
        out_shape=jax.ShapeDtypeStruct((B, C, L_pad), x.dtype),
        grid=grid,
        in_specs=[
            pl.BlockSpec((tb, C, tl), lambda b, l: (b, 0, l)),
            # g is grid-invariant: constant block index keeps it VMEM-resident.
            pl.BlockSpec((C, 1), lambda b, l: (0, 0)),
        ],
        out_specs=pl.BlockSpec((tb, C, tl), lambda b, l: (b, 0, l)),
        compiler_params=pltpu.CompilerParams(
            dimension_semantics=("parallel", "parallel"),
            vmem_limit_bytes=vmem_limit),
    )(xp, g2)

    return out if L_pad == L else out[:, :, :L]


# ----------------------------------------------------------------------------
def _ref_layer_norm(x, g, eps):
    mean = jnp.mean(x, axis=1, keepdims=True)
    var = jnp.mean((x - mean) ** 2, axis=1, keepdims=True)
    return (x - mean) * jax.lax.rsqrt(var + eps) * g


if __name__ == "__main__":
    key = jax.random.PRNGKey(0)
    kx, kg, kx2 = jax.random.split(key, 3)
    eps = 1e-5

    # nn.Parameter init is ones; perturb deterministically so scaling is exercised.
    C = 32
    g = 1.0 + 0.1 * jax.random.normal(kg, (1, C, 1), jnp.float32)

    # Case 1: lane-aligned length; exercises multi-row batch blocking (TB > 1).
    B, L = 4, 256
    x = jax.random.normal(kx, (B, C, L), jnp.float32)
    y = layer_norm(x, g)
    jax.block_until_ready(y)
    y_ref = _ref_layer_norm(x, g, eps)
    assert y.shape == x.shape
    assert bool(jnp.all(jnp.isfinite(y)))
    assert jnp.allclose(y, y_ref, atol=1e-4, rtol=1e-4), \
        float(jnp.max(jnp.abs(y - y_ref)))

    # Case 2: ragged length; exercises the pad-to-128 / slice path.
    B2, L2 = 2, 200
    x2 = jax.random.normal(kx2, (B2, C, L2), jnp.float32)
    y2 = layer_norm(x2, g)
    jax.block_until_ready(y2)
    y2_ref = _ref_layer_norm(x2, g, eps)
    assert y2.shape == x2.shape
    assert bool(jnp.all(jnp.isfinite(y2)))
    assert jnp.allclose(y2, y2_ref, atol=1e-4, rtol=1e-4), \
        float(jnp.max(jnp.abs(y2 - y2_ref)))

    print("KERNEL_OK")
</pallas_src>

<mosaic_0001>
module attributes {stable_mosaic.version = 11 : i64} {
  func.func @layernorm_kernel(%arg0: i32, %arg1: i32, %arg2: memref<2x32x256xf32, #tpu.memory_space<vmem>>, %arg3: memref<32x1xf32, #tpu.memory_space<vmem>>, %arg4: memref<2x32x256xf32, #tpu.memory_space<vmem>>) attributes {dimension_semantics = [#tpu.dimension_semantics<parallel>, #tpu.dimension_semantics<parallel>], iteration_bounds = array<i64: 2, 1>, scalar_prefetch = 0 : i64, scratch_operands = 0 : i64, tpu.core_type = #tpu.core_type<tc>, window_params = [{transform_indices = @transform_0, window_bounds = array<i64: 2, 32, 256>}, {pipeline_mode = #tpu.pipeline_mode<synchronous>, transform_indices = @transform_1, window_bounds = array<i64: 32, 1>}, {transform_indices = @transform_2, window_bounds = array<i64: 2, 32, 256>}]} {
    %c0 = arith.constant 0 : index
    %c0_0 = arith.constant 0 : index
    %c0_1 = arith.constant 0 : index
    %0 = vector.load %arg2[%c0, %c0_0, %c0_1] : memref<2x32x256xf32, #tpu.memory_space<vmem>>, vector<2x32x256xf32>
    %cst = arith.constant dense<0.000000e+00> : vector<2x256xf32>
    %1 = vector.multi_reduction <add>, %0, %cst [1] : vector<2x32x256xf32> to vector<2x256xf32>
    %2 = vector.shape_cast %1 : vector<2x256xf32> to vector<2x1x256xf32>
    %cst_2 = arith.constant 3.200000e+01 : f32
    %3 = vector.broadcast %cst_2 : f32 to vector<2x1x256xf32>
    %4 = arith.divf %2, %3 : vector<2x1x256xf32>
    %5 = vector.broadcast %4 : vector<2x1x256xf32> to vector<2x32x256xf32>
    %6 = arith.subf %0, %5 : vector<2x32x256xf32>
    %7 = arith.mulf %6, %6 : vector<2x32x256xf32>
    %cst_3 = arith.constant dense<0.000000e+00> : vector<2x256xf32>
    %8 = vector.multi_reduction <add>, %7, %cst_3 [1] : vector<2x32x256xf32> to vector<2x256xf32>
    %9 = vector.shape_cast %8 : vector<2x256xf32> to vector<2x1x256xf32>
    %cst_4 = arith.constant 3.200000e+01 : f32
    %10 = vector.broadcast %cst_4 : f32 to vector<2x1x256xf32>
    %11 = arith.divf %9, %10 : vector<2x1x256xf32>
    %cst_5 = arith.constant 9.99999974E-6 : f32
    %12 = vector.broadcast %cst_5 : f32 to vector<2x1x256xf32>
    %13 = arith.addf %11, %12 : vector<2x1x256xf32>
    %14 = math.rsqrt %13 : vector<2x1x256xf32>
    %15 = vector.broadcast %14 : vector<2x1x256xf32> to vector<2x32x256xf32>
    %16 = arith.mulf %6, %15 : vector<2x32x256xf32>
    %c0_6 = arith.constant 0 : index
    %c0_7 = arith.constant 0 : index
    %17 = vector.load %arg3[%c0_6, %c0_7] : memref<32x1xf32, #tpu.memory_space<vmem>>, vector<32x1xf32>
    %18 = vector.shape_cast %17 : vector<32x1xf32> to vector<1x32x1xf32>
    %19 = vector.broadcast %18 : vector<1x32x1xf32> to vector<2x32x256xf32>
    %20 = arith.mulf %16, %19 : vector<2x32x256xf32>
    %c0_8 = arith.constant 0 : index
    %c0_9 = arith.constant 0 : index
    %c0_10 = arith.constant 0 : index
    %21 = vector.load %arg4[%c0_8, %c0_9, %c0_10] : memref<2x32x256xf32, #tpu.memory_space<vmem>>, vector<2x32x256xf32>
    tpu.vector_store %arg4[%c0_8, %c0_9, %c0_10], %20 {strides = array<i32>} : memref<2x32x256xf32, #tpu.memory_space<vmem>>, vector<2x32x256xf32>,
    return
  }
  func.func @transform_0(%arg0: i32, %arg1: i32) -> (i32, i32, i32) {
    %c0_i32 = arith.constant 0 : i32
    %c0_i32_0 = arith.constant 0 : i32
    return %arg0, %c0_i32, %arg1 : i32, i32, i32
  }
  func.func @transform_1(%arg0: i32, %arg1: i32) -> (i32, i32) {
    %c0_i32 = arith.constant 0 : i32
    %c0_i32_0 = arith.constant 0 : i32
    %c0_i32_1 = arith.constant 0 : i32
    return %c0_i32, %c0_i32_0 : i32, i32
  }
  func.func @transform_2(%arg0: i32, %arg1: i32) -> (i32, i32, i32) {
    %c0_i32 = arith.constant 0 : i32
    %c0_i32_0 = arith.constant 0 : i32
    return %arg0, %c0_i32, %arg1 : i32, i32, i32
  }
}

</mosaic_0001>

<llo_original>
// kernel: tpu_custom_call.1
$region0: #{tpu_custom_call.1}
  #allocation0 [shape = 'u32[]', space=smem, size = 0x4, offset = 0x4, fixed_abs, tag = 'smem constant byte address 0x4 - core index']
  #allocation1 [shape = 'u32[72,128]{1,0:T(1,128)}', space=vmem, size = 0x9000, scoped, tag = 'internal scratch']
  %s0 = inlined_call_operand.hbm [shape: f32[4,32,256], index: 0, kind: input, shape index: {}]
  %s1 = inlined_call_operand.vmem [shape: f32[32,1], index: 1, kind: input, shape index: {}]
  %s2 = inlined_call_operand.hbm [shape: f32[4,32,256], index: 2, kind: output, shape index: {}]
  %s3 = sld [smem:[#allocation0]]
  $region45: #{tpu_custom_call.1} parent=0
    _
  %s5 = ssub.s32 1, %s3
  %s6 = scalar_select 0, %s5, %s3
  $region1: #{tpu_custom_call.1} parent=0
    #allocation2 [shape = 'u8[131072]{0}', space=vmem, size = 0x20000, scoped, tag = 'input window, operand 0']
    #allocation3 [shape = 's32[2]{0}', space=sflag, size = 0x8, scoped, tag = 'scoped memory for tpu_custom_call.1']
    #allocation4 [shape = 's32[2]{0}', space=sflag, size = 0x8, scoped, tag = 'scoped memory for tpu_custom_call.1']
    #allocation5 [shape = 'u8[131072]{0}', space=vmem, size = 0x20000, scoped, tag = 'output window, operand 0']
    %7 = vsyncpa [#allocation3], 0
    %s8 = scalar_lea.sflag [#allocation3], 1
    %9 = vsyncpa %s8, 0
    %10 = vsyncpa [#allocation4], 0
    %s11 = scalar_lea.sflag [#allocation4], 1
    %12 = vsyncpa %s11, 0
    loop: start=0, step=1, limit=4
    $region2: #{tpu_custom_call.1} parent=1 // loop_pre_header
      _
    $region3: #{tpu_custom_call.1} parent=1 // loop_header
      %s14 = sphi 0, %s18
      %p15 = scmp.ge.s32.totalorder %s14, 4
      %s21 = sphi 0, %s33
      %s22 = sphi 0, %s29
      %s23 = sphi 0, %s21
      %s24 = sphi 0, %s22
      %s25 = sphi 0, %s23
      %s26 = sphi 0, %s24
      %s38 = sphi 0, %s40
      %s41 = sphi 0, %s38
      %s42 = sphi 0, %s41
      %s58 = sphi 0, %s42
      %s62 = sphi 0, %s62
      %s64 = sphi 0, %s62
      %s65 = sphi 0, %s64
      %s79 = sphi 0, %s65
      %s87 = sphi 0, %s89
      %s90 = sphi 0, %s87
      %s91 = sphi 0, %s90
      %s107 = sphi 0, %s91
    $region4: #{tpu_custom_call.1} parent=1 // loop_header_branch
      %17 = sbr.rel (%p15) target = $region8
    $region5: #{tpu_custom_call.1} parent=1 // loop_body
      %s19 = ssub.s32 %s14, 1
      %s20 = ssub.s32 %s14, 2
      %s27 = sadd.s32 1, %s22
      %p28 = scmp.ge.s32.totalorder %s27, 1
      %s29 = scalar_select %p28, 0, %s27
      %s30 = sadd.s32 1, %s21
      %s31 = scalar_select %p28, %s30, %s21
      %p32 = scmp.ge.s32.totalorder %s31, 2
      %s33 = scalar_select %p32, 0, %s31
      %s34 = ssub.s32 %s21, %s33
      %s35 = ssub.s32 %s22, %s29
      %s36 = sor.u32 %s34, %s35
      %p37 = scmp.eq.s32.totalorder %s36, 0
      %s39 = sadd.s32 %s38, 1
      %s40 = scalar_select %p37, %s38, %s39
      %p43 = pneg %p37
      %p44 = scmp.eq.s32.totalorder %s14, 1
      %p45 = por %p43, %p44
      %p46 = scmp.ne.s32.totalorder %s38, %s41
      %p47 = scmp.eq.s32.totalorder %s14, 0
      %p48 = por %p46, %p47
      %p49 = scmp.ne.s32.totalorder %s38, %s41
      %p50 = scmp.eq.s32.totalorder %s19, 1
      %p51 = por %p49, %p50
      %p52 = scmp.ne.s32.totalorder %s41, %s42
      %p53 = scmp.eq.s32.totalorder %s19, 0
      %p54 = por %p52, %p53
      %p55 = scmp.ne.s32.totalorder %s41, %s42
      %p56 = scmp.eq.s32.totalorder %s20, 1
      %p57 = por %p55, %p56
      %p59 = scmp.ne.s32.totalorder %s42, %s58
      %p60 = scmp.eq.s32.totalorder %s20, 0
      %p61 = por %p59, %p60
      %s63 = sadd.s32 %s62, 1
      %p66 = scmp.eq.s32.totalorder %s14, 1
      %p67 = scmp.ne.s32.totalorder %s62, %s64
      %p68 = scmp.eq.s32.totalorder %s14, 0
      %p69 = por %p67, %p68
      %p70 = scmp.ne.s32.totalorder %s62, %s64
      %p71 = scmp.eq.s32.totalorder %s19, 1
      %p72 = por %p70, %p71
      %p73 = scmp.ne.s32.totalorder %s64, %s65
      %p74 = scmp.eq.s32.totalorder %s19, 0
      %p75 = por %p73, %p74
      %p76 = scmp.ne.s32.totalorder %s64, %s65
      %p77 = scmp.eq.s32.totalorder %s20, 1
      %p78 = por %p76, %p77
      %p80 = scmp.ne.s32.totalorder %s65, %s79
      %p81 = scmp.eq.s32.totalorder %s20, 0
      %p82 = por %p80, %p81
      %s83 = ssub.s32 %s21, %s33
      %s84 = ssub.s32 %s22, %s29
      %s85 = sor.u32 %s83, %s84
      %p86 = scmp.eq.s32.totalorder %s85, 0
      %s88 = sadd.s32 %s87, 1
      %s89 = scalar_select %p86, %s87, %s88
      %p92 = pneg %p86
      %p93 = scmp.eq.s32.totalorder %s14, 1
      %p94 = por %p92, %p93
      %p95 = scmp.ne.s32.totalorder %s87, %s90
      %p96 = scmp.eq.s32.totalorder %s14, 0
      %p97 = por %p95, %p96
      %p98 = scmp.ne.s32.totalorder %s87, %s90
      %p99 = scmp.eq.s32.totalorder %s19, 1
      %p100 = por %p98, %p99
      %p101 = scmp.ne.s32.totalorder %s90, %s91
      %p102 = scmp.eq.s32.totalorder %s19, 0
      %p103 = por %p101, %p102
      %p104 = scmp.ne.s32.totalorder %s90, %s91
      %p105 = scmp.eq.s32.totalorder %s20, 1
      %p106 = por %p104, %p105
      %p108 = scmp.ne.s32.totalorder %s91, %s107
      %p109 = scmp.eq.s32.totalorder %s20, 0
      %p110 = por %p108, %p109
      %p111 = scmp.le.s32.totalorder 1, %s14
      %p112 = scmp.lt.s32.totalorder %s14, 3
      %p113 = pnand %p111, %p112
      %p114 = pneg %p113
      // Predicated region
      $region9: #{tpu_custom_call.1} parent=5 // pred_check
        _
      $region10: #{tpu_custom_call.1} parent=5 // pred_check_branch
        %116 = sbr.rel (%p113) target = $region12
      $region11: #{tpu_custom_call.1} parent=5 // pred_region
        %s117 = ssub.s32 %s14, 1
        // Predicated region
        $region13: #{tpu_custom_call.1} parent=11 // pred_check
          %p118 = pneg %p75
        $region14: #{tpu_custom_call.1} parent=11 // pred_check_branch
          %120 = sbr.rel (%p118) target = $region16
        $region15: #{tpu_custom_call.1} parent=11 // pred_region
          _
        $region16: #{tpu_custom_call.1} parent=11 // pred_fallthru
          _
      $region12: #{tpu_custom_call.1} parent=5 // pred_fallthru
        _
      %p121 = scmp.lt.s32.totalorder %s14, 2
      // Predicated region
      $region17: #{tpu_custom_call.1} parent=5 // pred_check
        %p122 = pneg %p121
      $region18: #{tpu_custom_call.1} parent=5 // pred_check_branch
        %124 = sbr.rel (%p122) target = $region20
      $region19: #{tpu_custom_call.1} parent=5 // pred_region
        // Predicated region
        $region21: #{tpu_custom_call.1} parent=19 // pred_check
          %p125 = pneg %p48
        $region22: #{tpu_custom_call.1} parent=19 // pred_check_branch
          %127 = sbr.rel (%p125) target = $region24
        $region23: #{tpu_custom_call.1} parent=19 // pred_region
          %s128 = sand.u32 %s38, 1
          %s129 = scalar_lea.sflag [#allocation3], %s128
          %s130 = sand.u32 %s38, 1
          %s131 = smul.addr %s130, 128
          %s132 = scalar_lea.vmem [#allocation2], %s131
          %s133 = smul.u32 2, %s21
          %s134 = smul.u32 2, %s22
          %136 = vsyncadd %s129, 0
          %s137 = smul.addr %s133, 8
          %s138 = sadd.s32 %s134, %s137
          %s139 = smul.addr %s138, 8
          %s140 = scalar_lea.hbm %s0, %s139
          %s141 = sshll.u32 %s140, 4
          %s142 = int_to_ptr.hbm [resolvable:$true] %s141
          %s143 = sshll.u32 %s132, 4
          %s144 = int_to_ptr.vmem [resolvable:$true] %s143
          %149 = dma.hbm_to_vmem [thread:$0]  %s142, 2048, %s144, %s129, 256, 256, 16
        $region24: #{tpu_custom_call.1} parent=19 // pred_fallthru
          _
      $region20: #{tpu_custom_call.1} parent=5 // pred_fallthru
        _
      %p150 = scmp.le.s32.totalorder 1, %s14
      %p151 = scmp.lt.s32.totalorder %s14, 3
      %p152 = pnand %p150, %p151
      %p153 = pneg %p152
      // Predicated region
      $region25: #{tpu_custom_call.1} parent=5 // pred_check
        _
      $region26: #{tpu_custom_call.1} parent=5 // pred_check_branch
        %155 = sbr.rel (%p152) target = $region28
      $region27: #{tpu_custom_call.1} parent=5 // pred_region
        %s156 = ssub.s32 %s14, 1
        %s157 = sand.u32 %s41, 1
        %s158 = scalar_lea.sflag [#allocation3], %s157
        %s159 = sand.u32 %s41, 1
        %s160 = smul.addr %s159, 128
        %s161 = scalar_lea.vmem [#allocation2], %s160
        // Predicated region
        $region29: #{tpu_custom_call.1} parent=27 // pred_check
          %p162 = pneg %p54
        $region30: #{tpu_custom_call.1} parent=27 // pred_check_branch
          %164 = sbr.rel (%p162) target = $region32
        $region31: #{tpu_custom_call.1} parent=27 // pred_region
          %166 = dma.done %s158, 2048
        $region32: #{tpu_custom_call.1} parent=27 // pred_fallthru
          _
        %s167 = sand.u32 %s41, 1
        %s168 = scalar_lea.sflag [#allocation3], %s167
        %s169 = sand.u32 %s41, 1
        %s170 = smul.addr %s169, 128
        %s171 = scalar_lea.vmem [#allocation2], %s170
        %p172 = pneg %p54
        %p173 = pneg %p51
        %p174 = pneg %p75
        %p175 = pneg %p72
        %p176 = pneg %p103
        %p177 = pneg %p100
        %s178 = sand.u32 %s90, 1
        %s179 = scalar_lea.sflag [#allocation4], %s178
        %s180 = sand.u32 %s90, 1
        %s181 = smul.addr %s180, 128
        %s182 = scalar_lea.vmem [#allocation5], %s181
        %s183 = smul.u32 2, %s23
        %s184 = smul.u32 2, %s24
        %s185 = smul.u32 2, %s23
        %s186 = smul.u32 2, %s24
        %v187 = vld [vmem:[%s161] sm:$0xff]
        %v188 = vld [vmem:[%s161 + $0x8] sm:$0xff]
        %v189 = vld [vmem:[%s161 + $0x10] sm:$0xff]
        %v190 = vld [vmem:[%s161 + $0x18] sm:$0xff]
        %v191 = vld [vmem:[%s161 + $0x20] sm:$0xff]
        %v192 = vld [vmem:[%s161 + $0x28] sm:$0xff]
        %v193 = vld [vmem:[%s161 + $0x30] sm:$0xff]
        %v194 = vld [vmem:[%s161 + $0x38] sm:$0xff]
        %v195 = vld [vmem:[%s161 + $0x40] sm:$0xff]
        %v196 = vld [vmem:[%s161 + $0x48] sm:$0xff]
        %v197 = vld [vmem:[%s161 + $0x50] sm:$0xff]
        %v198 = vld [vmem:[%s161 + $0x58] sm:$0xff]
        %v199 = vld [vmem:[%s161 + $0x60] sm:$0xff]
        %v200 = vld [vmem:[%s161 + $0x68] sm:$0xff]
        %v201 = vld [vmem:[%s161 + $0x70] sm:$0xff]
        %v202 = vld [vmem:[%s161 + $0x78] sm:$0xff]
        %v203 = vadd.f32 %v187, %v189
        %v204 = vadd.f32 %v203, %v191
        %v205 = vadd.f32 %v204, %v193
        %v206 = vrot.slane %v205, 4
        %v207 = vadd.f32 %v205, %v206
        %v208 = vrot.slane %v207, 2
        %v209 = vadd.f32 %v207, %v208
        %v210 = vrot.slane %v209, 1
        %v211 = vadd.f32 %v209, %v210
        %v212 = vadd.f32 %v188, %v190
        %v213 = vadd.f32 %v212, %v192
        %v214 = vadd.f32 %v213, %v194
        %v215 = vrot.slane %v214, 4
        %v216 = vadd.f32 %v214, %v215
        %v217 = vrot.slane %v216, 2
        %v218 = vadd.f32 %v216, %v217
        %v219 = vrot.slane %v218, 1
        %v220 = vadd.f32 %v218, %v219
        %v221 = vadd.f32 %v195, %v197
        %v222 = vadd.f32 %v221, %v199
        %v223 = vadd.f32 %v222, %v201
        %v224 = vrot.slane %v223, 4
        %v225 = vadd.f32 %v223, %v224
        %v226 = vrot.slane %v225, 2
        %v227 = vadd.f32 %v225, %v226
        %v228 = vrot.slane %v227, 1
        %v229 = vadd.f32 %v227, %v228
        %v230 = vadd.f32 %v196, %v198
        %v231 = vadd.f32 %v230, %v200
        %v232 = vadd.f32 %v231, %v202
        %v233 = vrot.slane %v232, 4
        %v234 = vadd.f32 %v232, %v233
        %v235 = vrot.slane %v234, 2
        %v236 = vadd.f32 %v234, %v235
        %v237 = vrot.slane %v236, 1
        %v238 = vadd.f32 %v236, %v237
        %v239 = vrcp.pop 32.0
        %v240 = vmul.f32 32.0, %v239
        %v241 = vsub.f32 1.0, %v240
        %v242 = vmul.f32 %v239, %v241
        %v243 = vadd.f32 %v239, %v242
        %vm244 = vweird.f32 %v239
        %v245 = vsel %vm244, %v239, %v243
        %v246 = vmul.f32 %v211, %v245
        %v247 = vmul.f32 %v220, %v245
        %v248 = vmul.f32 %v229, %v245
        %v249 = vmul.f32 %v238, %v245
        %v250 = vsub.f32 %v187, %v246
        %v251 = vsub.f32 %v188, %v247
        %v252 = vsub.f32 %v189, %v246
        %v253 = vsub.f32 %v190, %v247
        %v254 = vsub.f32 %v191, %v246
        %v255 = vsub.f32 %v192, %v247
        %v256 = vsub.f32 %v193, %v246
        %v257 = vsub.f32 %v194, %v247
        %v258 = vsub.f32 %v195, %v248
        %v259 = vsub.f32 %v196, %v249
        %v260 = vsub.f32 %v197, %v248
        %v261 = vsub.f32 %v198, %v249
        %v262 = vsub.f32 %v199, %v248
        %v263 = vsub.f32 %v200, %v249
        %v264 = vsub.f32 %v201, %v248
        %v265 = vsub.f32 %v202, %v249
        %v266 = vmul.f32 %v250, %v250
        %v267 = vmul.f32 %v251, %v251
        %v268 = vmul.f32 %v252, %v252
        %v269 = vmul.f32 %v253, %v253
        %v270 = vmul.f32 %v254, %v254
        %v271 = vmul.f32 %v255, %v255
        %v272 = vmul.f32 %v256, %v256
        %v273 = vmul.f32 %v257, %v257
        %v274 = vmul.f32 %v258, %v258
        %v275 = vmul.f32 %v259, %v259
        %v276 = vmul.f32 %v260, %v260
        %v277 = vmul.f32 %v261, %v261
        %v278 = vmul.f32 %v262, %v262
        %v279 = vmul.f32 %v263, %v263
        %v280 = vmul.f32 %v264, %v264
        %v281 = vmul.f32 %v265, %v265
        %v282 = vadd.f32 %v266, %v268
        %v283 = vadd.f32 %v282, %v270
        %v284 = vadd.f32 %v283, %v272
        %v285 = vrot.slane %v284, 4
        %v286 = vadd.f32 %v284, %v285
        %v287 = vrot.slane %v286, 2
        %v288 = vadd.f32 %v286, %v287
        %v289 = vrot.slane %v288, 1
        %v290 = vadd.f32 %v288, %v289
        %v291 = vadd.f32 %v267, %v269
        %v292 = vadd.f32 %v291, %v271
        %v293 = vadd.f32 %v292, %v273
        %v294 = vrot.slane %v293, 4
        %v295 = vadd.f32 %v293, %v294
        %v296 = vrot.slane %v295, 2
        %v297 = vadd.f32 %v295, %v296
        %v298 = vrot.slane %v297, 1
        %v299 = vadd.f32 %v297, %v298
        %v300 = vadd.f32 %v274, %v276
        %v301 = vadd.f32 %v300, %v278
        %v302 = vadd.f32 %v301, %v280
        %v303 = vrot.slane %v302, 4
        %v304 = vadd.f32 %v302, %v303
        %v305 = vrot.slane %v304, 2
        %v306 = vadd.f32 %v304, %v305
        %v307 = vrot.slane %v306, 1
        %v308 = vadd.f32 %v306, %v307
        %v309 = vadd.f32 %v275, %v277
        %v310 = vadd.f32 %v309, %v279
        %v311 = vadd.f32 %v310, %v281
        %v312 = vrot.slane %v311, 4
        %v313 = vadd.f32 %v311, %v312
        %v314 = vrot.slane %v313, 2
        %v315 = vadd.f32 %v313, %v314
        %v316 = vrot.slane %v315, 1
        %v317 = vadd.f32 %v315, %v316
        %v318 = vmul.f32 %v290, %v245
        %v319 = vmul.f32 %v299, %v245
        %v320 = vmul.f32 %v308, %v245
        %v321 = vmul.f32 %v317, %v245
        %v322 = vadd.f32 %v318, 1e-05
        %v323 = vadd.f32 %v319, 1e-05
        %v324 = vadd.f32 %v320, 1e-05
        %v325 = vadd.f32 %v321, 1e-05
        %v326 = vrsqrt.pop %v322
        %v327 = vmul.f32 %v326, %v322
        %v328 = vmul.f32 %v327, %v326
        %v329 = vmul.f32 0.5, %v328
        %v330 = vsub.f32 1.5, %v329
        %v331 = vmul.f32 %v326, %v330
        %vm332 = vweird.f32 %v322
        %vm333 = vweird.f32 %v326
        %vm334 = vmor %vm332, %vm333
        %v335 = vsel %vm334, %v326, %v331
        %v336 = vrsqrt.pop %v323
        %v337 = vmul.f32 %v336, %v323
        %v338 = vmul.f32 %v337, %v336
        %v339 = vmul.f32 0.5, %v338
        %v340 = vsub.f32 1.5, %v339
        %v341 = vmul.f32 %v336, %v340
        %vm342 = vweird.f32 %v323
        %vm343 = vweird.f32 %v336
        %vm344 = vmor %vm342, %vm343
        %v345 = vsel %vm344, %v336, %v341
        %v346 = vrsqrt.pop %v324
        %v347 = vmul.f32 %v346, %v324
        %v348 = vmul.f32 %v347, %v346
        %v349 = vmul.f32 0.5, %v348
        %v350 = vsub.f32 1.5, %v349
        %v351 = vmul.f32 %v346, %v350
        %vm352 = vweird.f32 %v324
        %vm353 = vweird.f32 %v346
        %vm354 = vmor %vm352, %vm353
        %v355 = vsel %vm354, %v346, %v351
        %v356 = vrsqrt.pop %v325
        %v357 = vmul.f32 %v356, %v325
        %v358 = vmul.f32 %v357, %v356
        %v359 = vmul.f32 0.5, %v358
        %v360 = vsub.f32 1.5, %v359
        %v361 = vmul.f32 %v356, %v360
        %vm362 = vweird.f32 %v325
        %vm363 = vweird.f32 %v356
        %vm364 = vmor %vm362, %vm363
        %v365 = vsel %vm364, %v356, %v361
        %v366 = vmul.f32 %v250, %v335
        %v367 = vmul.f32 %v251, %v345
        %v368 = vmul.f32 %v252, %v335
        %v369 = vmul.f32 %v253, %v345
        %v370 = vmul.f32 %v254, %v335
        %v371 = vmul.f32 %v255, %v345
        %v372 = vmul.f32 %v256, %v335
        %v373 = vmul.f32 %v257, %v345
        %v374 = vmul.f32 %v258, %v355
        %v375 = vmul.f32 %v259, %v365
        %v376 = vmul.f32 %v260, %v355
        %v377 = vmul.f32 %v261, %v365
        %v378 = vmul.f32 %v262, %v355
        %v379 = vmul.f32 %v263, %v365
        %v380 = vmul.f32 %v264, %v355
        %v381 = vmul.f32 %v265, %v365
        %v382 = vld [vmem:[%s1] sm:$0xff]
        %v383 = vld [vmem:[%s1 + $0x8] sm:$0xff]
        %v384 = vld [vmem:[%s1 + $0x10] sm:$0xff]
        %v385 = vld [vmem:[%s1 + $0x18] sm:$0xff]
        %387 = vset.pattern.permute.xlu0 0
        %388 = vperm.xlu0 %387, %v382
        %v389 = vpop.permute.xlu0 %388
        %392 = vset.pattern.permute.xlu0 0
        %393 = vperm.xlu0 %392, %v383
        %v394 = vpop.permute.xlu0 %393
        %397 = vset.pattern.permute.xlu0 0
        %398 = vperm.xlu0 %397, %v384
        %v399 = vpop.permute.xlu0 %398
        %402 = vset.pattern.permute.xlu0 0
        %403 = vperm.xlu0 %402, %v385
        %v404 = vpop.permute.xlu0 %403
        %v406 = vmul.f32 %v366, %v389
        %v407 = vmul.f32 %v367, %v389
        %v408 = vmul.f32 %v368, %v394
        %v409 = vmul.f32 %v369, %v394
        %v410 = vmul.f32 %v370, %v399
        %v411 = vmul.f32 %v371, %v399
        %v412 = vmul.f32 %v372, %v404
        %v413 = vmul.f32 %v373, %v404
        %v414 = vmul.f32 %v374, %v389
        %v415 = vmul.f32 %v375, %v389
        %v416 = vmul.f32 %v376, %v394
        %v417 = vmul.f32 %v377, %v394
        %v418 = vmul.f32 %v378, %v399
        %v419 = vmul.f32 %v379, %v399
        %v420 = vmul.f32 %v380, %v404
        %v421 = vmul.f32 %v381, %v404
        %422 = vst [vmem:[%s182] sm:$0xff] %v406
        %423 = vst [vmem:[%s182 + $0x8] sm:$0xff] %v407
        %424 = vst [vmem:[%s182 + $0x10] sm:$0xff] %v408
        %425 = vst [vmem:[%s182 + $0x18] sm:$0xff] %v409
        %426 = vst [vmem:[%s182 + $0x20] sm:$0xff] %v410
        %427 = vst [vmem:[%s182 + $0x28] sm:$0xff] %v411
        %428 = vst [vmem:[%s182 + $0x30] sm:$0xff] %v412
        %429 = vst [vmem:[%s182 + $0x38] sm:$0xff] %v413
        %430 = vst [vmem:[%s182 + $0x40] sm:$0xff] %v414
        %431 = vst [vmem:[%s182 + $0x48] sm:$0xff] %v415
        %432 = vst [vmem:[%s182 + $0x50] sm:$0xff] %v416
        %433 = vst [vmem:[%s182 + $0x58] sm:$0xff] %v417
        %434 = vst [vmem:[%s182 + $0x60] sm:$0xff] %v418
        %435 = vst [vmem:[%s182 + $0x68] sm:$0xff] %v419
        %436 = vst [vmem:[%s182 + $0x70] sm:$0xff] %v420
        %437 = vst [vmem:[%s182 + $0x78] sm:$0xff] %v421
        %s438 = sand.u32 %s90, 1
        %s439 = scalar_lea.sflag [#allocation4], %s438
        %s440 = sand.u32 %s90, 1
        %s441 = smul.addr %s440, 128
        %s442 = scalar_lea.vmem [#allocation5], %s441
        // Predicated region
        $region33: #{tpu_custom_call.1} parent=27 // pred_check
          %p443 = pneg %p100
        $region34: #{tpu_custom_call.1} parent=27 // pred_check_branch
          %445 = sbr.rel (%p443) target = $region36
        $region35: #{tpu_custom_call.1} parent=27 // pred_region
          %s446 = smul.u32 2, %s23
          %s447 = smul.u32 2, %s24
          %449 = vsyncadd %s439, 0
          %s450 = smul.addr %s446, 8
          %s451 = sadd.s32 %s447, %s450
          %s452 = smul.addr %s451, 8
          %s453 = scalar_lea.hbm %s2, %s452
          %s454 = sshll.u32 %s442, 4
          %s455 = int_to_ptr.vmem [resolvable:$true] %s454
          %s456 = sshll.u32 %s453, 4
          %s457 = int_to_ptr.hbm [resolvable:$true] %s456
          %462 = dma.vmem_to_hbm [thread:$0]  %s455, 2048, %s457, %s439, 256, 256, 16
        $region36: #{tpu_custom_call.1} parent=27 // pred_fallthru
          _
      $region28: #{tpu_custom_call.1} parent=5 // pred_fallthru
        _
      %p463 = scmp.le.s32.totalorder 2, %s14
      // Predicated region
      $region37: #{tpu_custom_call.1} parent=5 // pred_check
        %p464 = pneg %p463
      $region38: #{tpu_custom_call.1} parent=5 // pred_check_branch
        %466 = sbr.rel (%p464) target = $region40
      $region39: #{tpu_custom_call.1} parent=5 // pred_region
        %s467 = ssub.s32 %s14, 2
        // Predicated region
        $region41: #{tpu_custom_call.1} parent=39 // pred_check
          %p468 = pneg %p106
        $region42: #{tpu_custom_call.1} parent=39 // pred_check_branch
          %470 = sbr.rel (%p468) target = $region44
        $region43: #{tpu_custom_call.1} parent=39 // pred_region
          %s471 = sand.u32 %s91, 1
          %s472 = scalar_lea.sflag [#allocation4], %s471
          %s473 = sand.u32 %s91, 1
          %s474 = smul.addr %s473, 128
          %s475 = scalar_lea.vmem [#allocation5], %s474
          %477 = dma.done %s472, 2048
        $region44: #{tpu_custom_call.1} parent=39 // pred_fallthru
          _
      $region40: #{tpu_custom_call.1} parent=5 // pred_fallthru
        _
    $region6: #{tpu_custom_call.1} parent=1 // loop_footer
      %s18 = sadd.s32 1, %s14
    $region7: #{tpu_custom_call.1} parent=1 // loop_footer_branch
      %13 = sbr.rel target = $region3
    $region8: #{tpu_custom_call.1} parent=1 // loop_exit
      _
    %478 = vsyncpa [#allocation3], 1
    %s479 = scalar_lea.sflag [#allocation3], 1
    %480 = vsyncpa %s479, 1
    %481 = vsyncpa [#allocation4], 1
    %s482 = scalar_lea.sflag [#allocation4], 1
    %483 = vsyncpa %s482, 1

</llo_original>
